<compile_context>
chip_gen: v5e
topology: v5e:2x2
jax: 0.10.0
libtpu: 0.0.40
codegen_flags: <defaults>
</compile_context>

<pallas_src>
import functools

import jax
import jax.numpy as jnp
from jax.experimental import pallas as pl
from jax.experimental.pallas import tpu as pltpu


def _round_up(a, m):
    return ((a + m - 1) // m) * m


def _autoencoder_kernel(x_ref, w_ref, bcol_ref, blast_ref, o_ref, *, num_layers, feat):
    """Whole encode+decode chain on one batch tile.

    x_ref     : [T, F]      stream-dtype activations (batch-major, native layout).
    w_ref     : [L*F, F]    bf16 weight slab; layer l occupies rows [l*F, (l+1)*F).
                            Layers 0..L-2 are stored as W (PyTorch [out, in]);
                            layer L-1 is stored as W^T ([in, out]).
    bcol_ref  : [L*F, 1]    f32 bias slab for layers 0..L-2 (column-broadcast).
    blast_ref : [1, F]      f32 bias row for the last layer.
    o_ref     : [T, F]      output tile (same layout as the input -> no wrapper .T).
    """
    x = x_ref[...]                                            # [T, F] (bf16)

    # Layer 0: h = ReLU(W0 @ x^T + b0) via an "nt" dot (contract lane dims of both
    # operands, q@k^T pattern) -> lane-dense [F, T] activations with no transpose op.
    w0 = w_ref[pl.ds(0, feat), :]
    acc = jax.lax.dot_general(w0, x, (((1,), (1,)), ((), ())),
                              preferred_element_type=jnp.float32)        # [F, T]
    h = jnp.maximum(acc + bcol_ref[pl.ds(0, feat), :], 0.0)              # f32 epilogue

    # Middle layers: standard "nn" dots, activations stay lane-dense [F, T].
    for l in range(1, num_layers - 1):
        w = w_ref[pl.ds(l * feat, feat), :]                              # static view
        acc = jnp.dot(w, h.astype(jnp.bfloat16),
                      preferred_element_type=jnp.float32)                # MXU, f32 acc
        h = jnp.maximum(acc + bcol_ref[pl.ds(l * feat, feat), :], 0.0)

    # Last layer: weight stored transposed, "tn" dot (contract sublane dims, the
    # flash-bwd dv pattern) so the result is already [T, F] and the store needs no
    # wrapper-side transpose over the activations.
    wl = w_ref[pl.ds((num_layers - 1) * feat, feat), :]                  # = W_last^T
    acc = jax.lax.dot_general(h.astype(jnp.bfloat16), wl,
                              (((0,), (0,)), ((), ())),
                              preferred_element_type=jnp.float32)        # [T, F]
    out = jnp.maximum(acc + blast_ref[...], 0.0)
    o_ref[...] = out.astype(o_ref.dtype)


def pack_autoencoder_params(weights, biases):
    """One-time packing of the 6 Linear layers into contiguous slabs (hoisted out of
    the per-forward path). Zero padding is self-consistent: padded rows/cols produce
    0 pre-activation, bias 0, ReLU(0)=0, so padding never leaks into real outputs."""
    num_layers = len(weights)
    assert num_layers >= 2
    dims_in = [w.shape[1] for w in weights]
    dims_out = [w.shape[0] for w in weights]

    # Common padded feature dim: multiple of 16 (bf16 sublane packing).
    feat = _round_up(max(dims_in + dims_out), 16)

    w_slab = jnp.zeros((num_layers * feat, feat), jnp.bfloat16)
    b_col = jnp.zeros((num_layers * feat, 1), jnp.float32)
    b_last = jnp.zeros((1, feat), jnp.float32)
    for l, (w, b) in enumerate(zip(weights, biases)):
        o, i = w.shape
        if l == num_layers - 1:
            w_slab = w_slab.at[l * feat:l * feat + i, :o].set(w.T.astype(jnp.bfloat16))
            b_last = b_last.at[0, :o].set(b.astype(jnp.float32))
        else:
            w_slab = w_slab.at[l * feat:l * feat + o, :i].set(w.astype(jnp.bfloat16))
            b_col = b_col.at[l * feat:l * feat + o, 0].set(b.astype(jnp.float32))

    return dict(w_slab=w_slab, b_col=b_col, b_last=b_last, feat=feat,
                num_layers=num_layers, d_in=dims_in[0], d_out=dims_out[-1])


def _pick_batch_tile(batch, requested):
    """Lane-aligned batch tile that keeps >=4 grid steps (>=2 per v7x TensorCore)
    whenever the batch allows; otherwise the largest 128-multiple that fits."""
    b128 = _round_up(batch, 128)
    cap = max(128, ((b128 // 4) // 128) * 128)          # aim for >=4 grid steps
    return max(128, min(_round_up(requested, 128), cap, b128))


def autoencoder_forward(x, params, *, batch_tile=1024, stream_dtype=jnp.bfloat16):
    """Forward pass of AutoEncoder (encode then decode, ReLU after every Linear).

    x      : [B, shape] activations (f32 or bf16; pass bf16 to avoid the cast pass).
    params : output of pack_autoencoder_params (computed once at init).
    """
    B, d = x.shape
    feat = params["feat"]
    num_layers = params["num_layers"]
    assert d == params["d_in"]

    tile = _pick_batch_tile(B, batch_tile)
    b_pad = _round_up(B, tile)
    grid = (b_pad // tile,)

    # Wrapper work on activations is limited to an optional dtype cast and an
    # optional zero-pad (no transpose, no repack). For aligned bf16 inputs it is zero.
    xs = x if x.dtype == stream_dtype else x.astype(stream_dtype)
    if b_pad != B or feat != d:
        xs = jnp.pad(xs, ((0, b_pad - B), (0, feat - d)))

    # VMEM is not binding for this kernel on any generation; keep an explicit,
    # recomputed limit (clamped under v7x's 64 MiB physical VMEM) anyway.
    stream_bytes = jnp.dtype(stream_dtype).itemsize
    out_bytes = jnp.dtype(x.dtype).itemsize
    slab_bytes = (params["w_slab"].size * 2 + params["b_col"].size * 4
                  + params["b_last"].size * 4)
    est = (slab_bytes
           + 2 * tile * feat * (stream_bytes + out_bytes)   # double-buffered in/out
           + 4 * tile * feat * 4)                           # f32 intermediates headroom
    vmem_limit = int(min(max(2 * est, 32 << 20), 56 << 20))

    kernel = functools.partial(_autoencoder_kernel, num_layers=num_layers, feat=feat)

    out = pl.pallas_call(
        kernel,
        out_shape=jax.ShapeDtypeStruct((b_pad, feat), x.dtype),
        grid_spec=pltpu.PrefetchScalarGridSpec(
            num_scalar_prefetch=0,
            grid=grid,
            in_specs=[
                pl.BlockSpec((tile, feat), lambda i: (i, 0)),            # activations
                pl.BlockSpec(params["w_slab"].shape, lambda i: (0, 0)),  # weights (resident)
                pl.BlockSpec(params["b_col"].shape, lambda i: (0, 0)),   # biases  (resident)
                pl.BlockSpec(params["b_last"].shape, lambda i: (0, 0)),  # last bias row
            ],
            out_specs=pl.BlockSpec((tile, feat), lambda i: (i, 0)),
        ),
        compiler_params=pltpu.CompilerParams(
            dimension_semantics=("parallel",),     # shard batch tiles across TCs
            vmem_limit_bytes=vmem_limit,
        ),
    )(xs, params["w_slab"], params["b_col"], params["b_last"])

    return out[:B, :params["d_out"]]


def reference_forward_f32(x, weights, biases):
    """Pure-f32 reference matching AutoEncoder.forward (Linear -> ReLU, 6x)."""
    h = x
    for w, b in zip(weights, biases):
        h = jnp.maximum(h @ w.T + b, 0.0)
    return h


def reference_forward_bf16(x, weights, biases):
    """Reference mirroring the kernel's numerics: bf16 operands, f32 accumulate,
    f32 bias+ReLU epilogue."""
    h = x.astype(jnp.bfloat16)
    for w, b in zip(weights, biases):
        acc = jnp.dot(h.astype(jnp.bfloat16), w.T.astype(jnp.bfloat16),
                      preferred_element_type=jnp.float32)
        h = jnp.maximum(acc + b, 0.0)
    return h


if __name__ == "__main__":
    # AutoEncoder(shape=32, layer1=24, layer2=16, layer3=8, activation=nn.ReLU())
    shape, layer1, layer2, layer3 = 32, 24, 16, 8
    batch = 1024   # -> 4 batch tiles of 256: >=2 grid steps per v7x TensorCore

    # encoder dims then mirrored decoder dims
    dims = [shape, layer1, layer2, layer3, layer2, layer1, shape]

    key = jax.random.PRNGKey(0)
    key, kx = jax.random.split(key)
    x = jax.random.normal(kx, (batch, shape), jnp.float32)

    # PyTorch nn.Linear-style init: U(-1/sqrt(fan_in), 1/sqrt(fan_in)), W is [out, in].
    weights, biases = [], []
    for fan_in, fan_out in zip(dims[:-1], dims[1:]):
        key, kw, kb = jax.random.split(key, 3)
        bound = 1.0 / jnp.sqrt(float(fan_in))
        weights.append(jax.random.uniform(kw, (fan_out, fan_in), jnp.float32, -bound, bound))
        biases.append(jax.random.uniform(kb, (fan_out,), jnp.float32, -bound, bound))

    # Slab packing happens once at "model init", not per forward call.
    params = pack_autoencoder_params(weights, biases)

    out = autoencoder_forward(x, params)
    out = jax.block_until_ready(out)
    assert out.shape == (batch, shape)

    # Tight check vs a reference that mirrors the kernel's bf16/f32 numerics, plus a
    # looser check vs true f32 nn.Linear semantics (bf16 operands are not bit-exact).
    ref_bf16 = reference_forward_bf16(x, weights, biases)
    ref_f32 = reference_forward_f32(x, weights, biases)
    assert jnp.allclose(out, ref_bf16, atol=1e-3, rtol=1e-3), "mismatch vs bf16 reference"
    assert jnp.allclose(out, ref_f32, atol=5e-2, rtol=5e-2), "mismatch vs f32 reference"

    print("KERNEL_OK")
</pallas_src>

<mosaic_0001>
module attributes {stable_mosaic.version = 11 : i64} {
  func.func @_autoencoder_kernel(%arg0: i32, %arg1: memref<256x32xbf16, #tpu.memory_space<vmem>>, %arg2: memref<192x32xbf16, #tpu.memory_space<vmem>>, %arg3: memref<192x1xf32, #tpu.memory_space<vmem>>, %arg4: memref<1x32xf32, #tpu.memory_space<vmem>>, %arg5: memref<256x32xf32, #tpu.memory_space<vmem>>) attributes {dimension_semantics = [#tpu.dimension_semantics<parallel>], iteration_bounds = array<i64: 4>, scalar_prefetch = 0 : i64, scratch_operands = 0 : i64, tpu.core_type = #tpu.core_type<tc>, window_params = [{transform_indices = @transform_0, window_bounds = array<i64: 256, 32>}, {pipeline_mode = #tpu.pipeline_mode<synchronous>, transform_indices = @transform_1, window_bounds = array<i64: 192, 32>}, {pipeline_mode = #tpu.pipeline_mode<synchronous>, transform_indices = @transform_2, window_bounds = array<i64: 192, 1>}, {pipeline_mode = #tpu.pipeline_mode<synchronous>, transform_indices = @transform_3, window_bounds = array<i64: 1, 32>}, {transform_indices = @transform_4, window_bounds = array<i64: 256, 32>}]} {
    %c0 = arith.constant 0 : index
    %c0_0 = arith.constant 0 : index
    %0 = vector.load %arg1[%c0, %c0_0] : memref<256x32xbf16, #tpu.memory_space<vmem>>, vector<256x32xbf16>
    %c0_1 = arith.constant 0 : index
    %c0_2 = arith.constant 0 : index
    %1 = vector.load %arg2[%c0_1, %c0_2] : memref<192x32xbf16, #tpu.memory_space<vmem>>, vector<32x32xbf16>
    %cst = arith.constant dense<0.000000e+00> : vector<32x256xf32>
    %2 = tpu.matmul %1, %0, %cst {dimension_numbers = #tpu.dot_dimension_numbers<[1], [1], [0], [0], [0, 0, 1, 0], [], []>} : vector<32x32xbf16>, vector<256x32xbf16>, vector<32x256xf32> -> vector<32x256xf32>
    %c0_3 = arith.constant 0 : index
    %c0_4 = arith.constant 0 : index
    %3 = vector.load %arg3[%c0_3, %c0_4] : memref<192x1xf32, #tpu.memory_space<vmem>>, vector<32x1xf32>
    %4 = vector.broadcast %3 : vector<32x1xf32> to vector<32x256xf32>
    %5 = arith.addf %2, %4 : vector<32x256xf32>
    %cst_5 = arith.constant 0.000000e+00 : f32
    %6 = vector.broadcast %cst_5 : f32 to vector<32x256xf32>
    %7 = arith.maximumf %5, %6 : vector<32x256xf32>
    %c32 = arith.constant 32 : index
    %c0_6 = arith.constant 0 : index
    %8 = vector.load %arg2[%c32, %c0_6] : memref<192x32xbf16, #tpu.memory_space<vmem>>, vector<32x32xbf16>
    %9 = arith.truncf %7 : vector<32x256xf32> to vector<32x256xbf16>
    %cst_7 = arith.constant dense<0.000000e+00> : vector<32x256xf32>
    %10 = tpu.matmul %8, %9, %cst_7 {dimension_numbers = #tpu.dot_dimension_numbers<[1], [0], [0], [1], [0, 0, 1, 1], [], []>} : vector<32x32xbf16>, vector<32x256xbf16>, vector<32x256xf32> -> vector<32x256xf32>
    %c32_8 = arith.constant 32 : index
    %c0_9 = arith.constant 0 : index
    %11 = vector.load %arg3[%c32_8, %c0_9] : memref<192x1xf32, #tpu.memory_space<vmem>>, vector<32x1xf32>
    %12 = vector.broadcast %11 : vector<32x1xf32> to vector<32x256xf32>
    %13 = arith.addf %10, %12 : vector<32x256xf32>
    %cst_10 = arith.constant 0.000000e+00 : f32
    %14 = vector.broadcast %cst_10 : f32 to vector<32x256xf32>
    %15 = arith.maximumf %13, %14 : vector<32x256xf32>
    %c64 = arith.constant 64 : index
    %c0_11 = arith.constant 0 : index
    %16 = vector.load %arg2[%c64, %c0_11] : memref<192x32xbf16, #tpu.memory_space<vmem>>, vector<32x32xbf16>
    %17 = arith.truncf %15 : vector<32x256xf32> to vector<32x256xbf16>
    %cst_12 = arith.constant dense<0.000000e+00> : vector<32x256xf32>
    %18 = tpu.matmul %16, %17, %cst_12 {dimension_numbers = #tpu.dot_dimension_numbers<[1], [0], [0], [1], [0, 0, 1, 1], [], []>} : vector<32x32xbf16>, vector<32x256xbf16>, vector<32x256xf32> -> vector<32x256xf32>
    %c64_13 = arith.constant 64 : index
    %c0_14 = arith.constant 0 : index
    %19 = vector.load %arg3[%c64_13, %c0_14] : memref<192x1xf32, #tpu.memory_space<vmem>>, vector<32x1xf32>
    %20 = vector.broadcast %19 : vector<32x1xf32> to vector<32x256xf32>
    %21 = arith.addf %18, %20 : vector<32x256xf32>
    %cst_15 = arith.constant 0.000000e+00 : f32
    %22 = vector.broadcast %cst_15 : f32 to vector<32x256xf32>
    %23 = arith.maximumf %21, %22 : vector<32x256xf32>
    %c96 = arith.constant 96 : index
    %c0_16 = arith.constant 0 : index
    %24 = vector.load %arg2[%c96, %c0_16] : memref<192x32xbf16, #tpu.memory_space<vmem>>, vector<32x32xbf16>
    %25 = arith.truncf %23 : vector<32x256xf32> to vector<32x256xbf16>
    %cst_17 = arith.constant dense<0.000000e+00> : vector<32x256xf32>
    %26 = tpu.matmul %24, %25, %cst_17 {dimension_numbers = #tpu.dot_dimension_numbers<[1], [0], [0], [1], [0, 0, 1, 1], [], []>} : vector<32x32xbf16>, vector<32x256xbf16>, vector<32x256xf32> -> vector<32x256xf32>
    %c96_18 = arith.constant 96 : index
    %c0_19 = arith.constant 0 : index
    %27 = vector.load %arg3[%c96_18, %c0_19] : memref<192x1xf32, #tpu.memory_space<vmem>>, vector<32x1xf32>
    %28 = vector.broadcast %27 : vector<32x1xf32> to vector<32x256xf32>
    %29 = arith.addf %26, %28 : vector<32x256xf32>
    %cst_20 = arith.constant 0.000000e+00 : f32
    %30 = vector.broadcast %cst_20 : f32 to vector<32x256xf32>
    %31 = arith.maximumf %29, %30 : vector<32x256xf32>
    %c128 = arith.constant 128 : index
    %c0_21 = arith.constant 0 : index
    %32 = vector.load %arg2[%c128, %c0_21] : memref<192x32xbf16, #tpu.memory_space<vmem>>, vector<32x32xbf16>
    %33 = arith.truncf %31 : vector<32x256xf32> to vector<32x256xbf16>
    %cst_22 = arith.constant dense<0.000000e+00> : vector<32x256xf32>
    %34 = tpu.matmul %32, %33, %cst_22 {dimension_numbers = #tpu.dot_dimension_numbers<[1], [0], [0], [1], [0, 0, 1, 1], [], []>} : vector<32x32xbf16>, vector<32x256xbf16>, vector<32x256xf32> -> vector<32x256xf32>
    %c128_23 = arith.constant 128 : index
    %c0_24 = arith.constant 0 : index
    %35 = vector.load %arg3[%c128_23, %c0_24] : memref<192x1xf32, #tpu.memory_space<vmem>>, vector<32x1xf32>
    %36 = vector.broadcast %35 : vector<32x1xf32> to vector<32x256xf32>
    %37 = arith.addf %34, %36 : vector<32x256xf32>
    %cst_25 = arith.constant 0.000000e+00 : f32
    %38 = vector.broadcast %cst_25 : f32 to vector<32x256xf32>
    %39 = arith.maximumf %37, %38 : vector<32x256xf32>
    %c160 = arith.constant 160 : index
    %c0_26 = arith.constant 0 : index
    %40 = vector.load %arg2[%c160, %c0_26] : memref<192x32xbf16, #tpu.memory_space<vmem>>, vector<32x32xbf16>
    %41 = arith.truncf %39 : vector<32x256xf32> to vector<32x256xbf16>
    %cst_27 = arith.constant dense<0.000000e+00> : vector<256x32xf32>
    %42 = tpu.matmul %41, %40, %cst_27 {dimension_numbers = #tpu.dot_dimension_numbers<[0], [0], [1], [1], [0, 1, 1, 1], [], []>} : vector<32x256xbf16>, vector<32x32xbf16>, vector<256x32xf32> -> vector<256x32xf32>
    %c0_28 = arith.constant 0 : index
    %c0_29 = arith.constant 0 : index
    %43 = vector.load %arg4[%c0_28, %c0_29] : memref<1x32xf32, #tpu.memory_space<vmem>>, vector<1x32xf32>
    %44 = vector.broadcast %43 : vector<1x32xf32> to vector<256x32xf32>
    %45 = arith.addf %42, %44 : vector<256x32xf32>
    %cst_30 = arith.constant 0.000000e+00 : f32
    %46 = vector.broadcast %cst_30 : f32 to vector<256x32xf32>
    %47 = arith.maximumf %45, %46 : vector<256x32xf32>
    %c0_31 = arith.constant 0 : index
    %c0_32 = arith.constant 0 : index
    %48 = vector.load %arg5[%c0_31, %c0_32] : memref<256x32xf32, #tpu.memory_space<vmem>>, vector<256x32xf32>
    tpu.vector_store %arg5[%c0_31, %c0_32], %47 {strides = array<i32>} : memref<256x32xf32, #tpu.memory_space<vmem>>, vector<256x32xf32>,
    return
  }
  func.func @transform_0(%arg0: i32) -> (i32, i32) {
    %c0_i32 = arith.constant 0 : i32
    %c0_i32_0 = arith.constant 0 : i32
    return %arg0, %c0_i32 : i32, i32
  }
  func.func @transform_1(%arg0: i32) -> (i32, i32) {
    %c0_i32 = arith.constant 0 : i32
    %c0_i32_0 = arith.constant 0 : i32
    %c0_i32_1 = arith.constant 0 : i32
    return %c0_i32, %c0_i32_0 : i32, i32
  }
  func.func @transform_2(%arg0: i32) -> (i32, i32) {
    %c0_i32 = arith.constant 0 : i32
    %c0_i32_0 = arith.constant 0 : i32
    %c0_i32_1 = arith.constant 0 : i32
    return %c0_i32, %c0_i32_0 : i32, i32
  }
  func.func @transform_3(%arg0: i32) -> (i32, i32) {
    %c0_i32 = arith.constant 0 : i32
    %c0_i32_0 = arith.constant 0 : i32
    %c0_i32_1 = arith.constant 0 : i32
    return %c0_i32, %c0_i32_0 : i32, i32
  }
  func.func @transform_4(%arg0: i32) -> (i32, i32) {
    %c0_i32 = arith.constant 0 : i32
    %c0_i32_0 = arith.constant 0 : i32
    return %arg0, %c0_i32 : i32, i32
  }
}

</mosaic_0001>

<llo_original>
// kernel: tpu_custom_call.1
$region0: #{tpu_custom_call.1}
  #allocation0 [shape = 'u32[]', space=smem, size = 0x4, offset = 0x4, fixed_abs, tag = 'smem constant byte address 0x4 - core index']
  #allocation1 [shape = 'u32[72,128]{1,0:T(1,128)}', space=vmem, size = 0x9000, scoped, tag = 'internal scratch']
  %s0 = inlined_call_operand.vmem [shape: bf16[1024,32], index: 0, kind: input, shape index: {}]
  %s1 = inlined_call_operand.vmem [shape: bf16[192,32], index: 1, kind: input, shape index: {}]
  %s2 = inlined_call_operand.vmem [shape: f32[192,1], index: 2, kind: input, shape index: {}]
  %s3 = inlined_call_operand.vmem [shape: f32[1,32], index: 3, kind: input, shape index: {}]
  %s4 = inlined_call_operand.vmem [shape: f32[1024,32], index: 4, kind: output, shape index: {}]
  %s5 = sld [smem:[#allocation0]]
  $region49: #{tpu_custom_call.1} parent=0
    _
  %s7 = ssub.s32 1, %s5
  %s8 = scalar_select 0, %s7, %s5
  loop: start=0, step=1, limit=6
  $region2: #{tpu_custom_call.1} parent=0 // loop_pre_header
    _
  $region3: #{tpu_custom_call.1} parent=0 // loop_header
    %s10 = sphi 0, %s14
    %p11 = scmp.ge.s32.totalorder %s10, 6
    %s20 = sphi 0, %s22
    %s23 = sphi 0, %s20
    %s24 = sphi 0, %s23
    %s40 = sphi 0, %s24
    %s44 = sphi 0, %s44
    %s46 = sphi 0, %s44
    %s47 = sphi 0, %s46
    %s61 = sphi 0, %s47
    %s65 = sphi 0, %s65
    %s67 = sphi 0, %s65
    %s68 = sphi 0, %s67
    %s82 = sphi 0, %s68
    %s86 = sphi 0, %s86
    %s88 = sphi 0, %s86
    %s89 = sphi 0, %s88
    %s103 = sphi 0, %s89
    %s109 = sphi 0, %s111
    %s112 = sphi 0, %s109
    %s113 = sphi 0, %s112
    %s129 = sphi 0, %s113
  $region4: #{tpu_custom_call.1} parent=0 // loop_header_branch
    %13 = sbr.rel (%p11) target = $region8
  $region5: #{tpu_custom_call.1} parent=0 // loop_body
    %s15 = ssub.s32 %s10, 1
    %s16 = ssub.s32 %s10, 2
    %s17 = sadd.s32 %s10, 1
    %s18 = ssub.s32 %s10, %s17
    %p19 = scmp.eq.s32.totalorder %s18, 0
    %s21 = sadd.s32 %s20, 1
    %s22 = scalar_select %p19, %s20, %s21
    %p25 = pneg %p19
    %p26 = scmp.eq.s32.totalorder %s10, 3
    %p27 = por %p25, %p26
    %p28 = scmp.ne.s32.totalorder %s20, %s23
    %p29 = scmp.eq.s32.totalorder %s10, 0
    %p30 = por %p28, %p29
    %p31 = scmp.ne.s32.totalorder %s20, %s23
    %p32 = scmp.eq.s32.totalorder %s15, 3
    %p33 = por %p31, %p32
    %p34 = scmp.ne.s32.totalorder %s23, %s24
    %p35 = scmp.eq.s32.totalorder %s15, 0
    %p36 = por %p34, %p35
    %p37 = scmp.ne.s32.totalorder %s23, %s24
    %p38 = scmp.eq.s32.totalorder %s16, 3
    %p39 = por %p37, %p38
    %p41 = scmp.ne.s32.totalorder %s24, %s40
    %p42 = scmp.eq.s32.totalorder %s16, 0
    %p43 = por %p41, %p42
    %s45 = sadd.s32 %s44, 1
    %p48 = scmp.eq.s32.totalorder %s10, 3
    %p49 = scmp.ne.s32.totalorder %s44, %s46
    %p50 = scmp.eq.s32.totalorder %s10, 0
    %p51 = por %p49, %p50
    %p52 = scmp.ne.s32.totalorder %s44, %s46
    %p53 = scmp.eq.s32.totalorder %s15, 3
    %p54 = por %p52, %p53
    %p55 = scmp.ne.s32.totalorder %s46, %s47
    %p56 = scmp.eq.s32.totalorder %s15, 0
    %p57 = por %p55, %p56
    %p58 = scmp.ne.s32.totalorder %s46, %s47
    %p59 = scmp.eq.s32.totalorder %s16, 3
    %p60 = por %p58, %p59
    %p62 = scmp.ne.s32.totalorder %s47, %s61
    %p63 = scmp.eq.s32.totalorder %s16, 0
    %p64 = por %p62, %p63
    %s66 = sadd.s32 %s65, 1
    %p69 = scmp.eq.s32.totalorder %s10, 3
    %p70 = scmp.ne.s32.totalorder %s65, %s67
    %p71 = scmp.eq.s32.totalorder %s10, 0
    %p72 = por %p70, %p71
    %p73 = scmp.ne.s32.totalorder %s65, %s67
    %p74 = scmp.eq.s32.totalorder %s15, 3
    %p75 = por %p73, %p74
    %p76 = scmp.ne.s32.totalorder %s67, %s68
    %p77 = scmp.eq.s32.totalorder %s15, 0
    %p78 = por %p76, %p77
    %p79 = scmp.ne.s32.totalorder %s67, %s68
    %p80 = scmp.eq.s32.totalorder %s16, 3
    %p81 = por %p79, %p80
    %p83 = scmp.ne.s32.totalorder %s68, %s82
    %p84 = scmp.eq.s32.totalorder %s16, 0
    %p85 = por %p83, %p84
    %s87 = sadd.s32 %s86, 1
    %p90 = scmp.eq.s32.totalorder %s10, 3
    %p91 = scmp.ne.s32.totalorder %s86, %s88
    %p92 = scmp.eq.s32.totalorder %s10, 0
    %p93 = por %p91, %p92
    %p94 = scmp.ne.s32.totalorder %s86, %s88
    %p95 = scmp.eq.s32.totalorder %s15, 3
    %p96 = por %p94, %p95
    %p97 = scmp.ne.s32.totalorder %s88, %s89
    %p98 = scmp.eq.s32.totalorder %s15, 0
    %p99 = por %p97, %p98
    %p100 = scmp.ne.s32.totalorder %s88, %s89
    %p101 = scmp.eq.s32.totalorder %s16, 3
    %p102 = por %p100, %p101
    %p104 = scmp.ne.s32.totalorder %s89, %s103
    %p105 = scmp.eq.s32.totalorder %s16, 0
    %p106 = por %p104, %p105
    %s107 = ssub.s32 %s10, %s17
    %p108 = scmp.eq.s32.totalorder %s107, 0
    %s110 = sadd.s32 %s109, 1
    %s111 = scalar_select %p108, %s109, %s110
    %p114 = pneg %p108
    %p115 = scmp.eq.s32.totalorder %s10, 3
    %p116 = por %p114, %p115
    %p117 = scmp.ne.s32.totalorder %s109, %s112
    %p118 = scmp.eq.s32.totalorder %s10, 0
    %p119 = por %p117, %p118
    %p120 = scmp.ne.s32.totalorder %s109, %s112
    %p121 = scmp.eq.s32.totalorder %s15, 3
    %p122 = por %p120, %p121
    %p123 = scmp.ne.s32.totalorder %s112, %s113
    %p124 = scmp.eq.s32.totalorder %s15, 0
    %p125 = por %p123, %p124
    %p126 = scmp.ne.s32.totalorder %s112, %s113
    %p127 = scmp.eq.s32.totalorder %s16, 3
    %p128 = por %p126, %p127
    %p130 = scmp.ne.s32.totalorder %s113, %s129
    %p131 = scmp.eq.s32.totalorder %s16, 0
    %p132 = por %p130, %p131
    %p133 = scmp.le.s32.totalorder 1, %s10
    %p134 = scmp.lt.s32.totalorder %s10, 5
    %p135 = pnand %p133, %p134
    %p136 = pneg %p135
    // Predicated region
    $region9: #{tpu_custom_call.1} parent=5 // pred_check
      _
    $region10: #{tpu_custom_call.1} parent=5 // pred_check_branch
      %138 = sbr.rel (%p135) target = $region12
    $region11: #{tpu_custom_call.1} parent=5 // pred_region
      %s139 = ssub.s32 %s10, 1
      // Predicated region
      $region13: #{tpu_custom_call.1} parent=11 // pred_check
        %p140 = pneg %p57
      $region14: #{tpu_custom_call.1} parent=11 // pred_check_branch
        %142 = sbr.rel (%p140) target = $region16
      $region15: #{tpu_custom_call.1} parent=11 // pred_region
        _
      $region16: #{tpu_custom_call.1} parent=11 // pred_fallthru
        _
      // Predicated region
      $region17: #{tpu_custom_call.1} parent=11 // pred_check
        %p143 = pneg %p78
      $region18: #{tpu_custom_call.1} parent=11 // pred_check_branch
        %145 = sbr.rel (%p143) target = $region20
      $region19: #{tpu_custom_call.1} parent=11 // pred_region
        _
      $region20: #{tpu_custom_call.1} parent=11 // pred_fallthru
        _
      // Predicated region
      $region21: #{tpu_custom_call.1} parent=11 // pred_check
        %p146 = pneg %p99
      $region22: #{tpu_custom_call.1} parent=11 // pred_check_branch
        %148 = sbr.rel (%p146) target = $region24
      $region23: #{tpu_custom_call.1} parent=11 // pred_region
        _
      $region24: #{tpu_custom_call.1} parent=11 // pred_fallthru
        _
    $region12: #{tpu_custom_call.1} parent=5 // pred_fallthru
      _
    %p149 = scmp.lt.s32.totalorder %s10, 4
    // Predicated region
    $region25: #{tpu_custom_call.1} parent=5 // pred_check
      %p150 = pneg %p149
    $region26: #{tpu_custom_call.1} parent=5 // pred_check_branch
      %152 = sbr.rel (%p150) target = $region28
    $region27: #{tpu_custom_call.1} parent=5 // pred_region
      // Predicated region
      $region29: #{tpu_custom_call.1} parent=27 // pred_check
        %p153 = pneg %p30
      $region30: #{tpu_custom_call.1} parent=27 // pred_check_branch
        %155 = sbr.rel (%p153) target = $region32
      $region31: #{tpu_custom_call.1} parent=27 // pred_region
        %s156 = smul.u32 32, %s10
        %p157 = scmp.lt.s32.totalorder %s156, 127
        %s158 = scalar_select %p157, %s156, 127
        %s159 = smul.addr %s158, 4
        %s160 = scalar_lea.vmem %s0, %s159
        %s161 = smul.u32 32, %s10
      $region32: #{tpu_custom_call.1} parent=27 // pred_fallthru
        _
    $region28: #{tpu_custom_call.1} parent=5 // pred_fallthru
      _
    %p162 = scmp.le.s32.totalorder 1, %s10
    %p163 = scmp.lt.s32.totalorder %s10, 5
    %p164 = pnand %p162, %p163
    %p165 = pneg %p164
    // Predicated region
    $region33: #{tpu_custom_call.1} parent=5 // pred_check
      _
    $region34: #{tpu_custom_call.1} parent=5 // pred_check_branch
      %167 = sbr.rel (%p164) target = $region36
    $region35: #{tpu_custom_call.1} parent=5 // pred_region
      %s168 = ssub.s32 %s10, 1
      %s169 = smul.u32 32, %s15
      %p170 = scmp.lt.s32.totalorder %s169, 127
      %s171 = scalar_select %p170, %s169, 127
      %s172 = smul.addr %s171, 4
      %s173 = scalar_lea.vmem %s0, %s172
      %p174 = pneg %p36
      %p175 = pneg %p33
      %p176 = pneg %p57
      %p177 = pneg %p54
      %p178 = pneg %p78
      %p179 = pneg %p75
      %p180 = pneg %p99
      %p181 = pneg %p96
      %p182 = pneg %p125
      %p183 = pneg %p122
      %s184 = smul.u32 32, %s15
      %p185 = scmp.lt.s32.totalorder %s184, 127
      %s186 = scalar_select %p185, %s184, 127
      %s187 = smul.addr %s186, 8
      %s188 = scalar_lea.vmem %s4, %s187
      %s189 = smul.u32 32, %s15
      %p190 = scmp.lt.s32.totalorder %s189, 127
      %s191 = scalar_select %p190, %s189, 127
      %s192 = smul.addr %s191, 4
      %s193 = scalar_lea.vmem %s0, %s192
      %s194 = smul.u32 32, %s15
      %s195 = smul.u32 32, %s15
      %p196 = scmp.lt.s32.totalorder %s195, 127
      %s197 = scalar_select %p196, %s195, 127
      %s198 = smul.addr %s197, 8
      %s199 = scalar_lea.vmem %s4, %s198
      %s200 = smul.u32 32, %s15
      %v202 = vld [vmem:[%s193] sm:$0xf]
      %v203 = vld [vmem:[%s193 + $0x4] sm:$0xf]
      %v204 = vld [vmem:[%s193 + $0x8] sm:$0xf]
      %v205 = vld [vmem:[%s193 + $0xc] sm:$0xf]
      %v206 = vld [vmem:[%s193 + $0x10] sm:$0xf]
      %v207 = vld [vmem:[%s193 + $0x14] sm:$0xf]
      %v208 = vld [vmem:[%s193 + $0x18] sm:$0xf]
      %v209 = vld [vmem:[%s193 + $0x1c] sm:$0xf]
      %v210 = vld [vmem:[%s193 + $0x20] sm:$0xf]
      %v211 = vld [vmem:[%s193 + $0x24] sm:$0xf]
      %v212 = vld [vmem:[%s193 + $0x28] sm:$0xf]
      %v213 = vld [vmem:[%s193 + $0x2c] sm:$0xf]
      %v214 = vld [vmem:[%s193 + $0x30] sm:$0xf]
      %v215 = vld [vmem:[%s193 + $0x34] sm:$0xf]
      %v216 = vld [vmem:[%s193 + $0x38] sm:$0xf]
      %v217 = vld [vmem:[%s193 + $0x3c] sm:$0xf]
      %v218 = vld [vmem:[%s193 + $0x40] sm:$0xf]
      %v219 = vld [vmem:[%s193 + $0x44] sm:$0xf]
      %v220 = vld [vmem:[%s193 + $0x48] sm:$0xf]
      %v221 = vld [vmem:[%s193 + $0x4c] sm:$0xf]
      %v222 = vld [vmem:[%s193 + $0x50] sm:$0xf]
      %v223 = vld [vmem:[%s193 + $0x54] sm:$0xf]
      %v224 = vld [vmem:[%s193 + $0x58] sm:$0xf]
      %v225 = vld [vmem:[%s193 + $0x5c] sm:$0xf]
      %v226 = vld [vmem:[%s193 + $0x60] sm:$0xf]
      %v227 = vld [vmem:[%s193 + $0x64] sm:$0xf]
      %v228 = vld [vmem:[%s193 + $0x68] sm:$0xf]
      %v229 = vld [vmem:[%s193 + $0x6c] sm:$0xf]
      %v230 = vld [vmem:[%s193 + $0x70] sm:$0xf]
      %v231 = vld [vmem:[%s193 + $0x74] sm:$0xf]
      %v232 = vld [vmem:[%s193 + $0x78] sm:$0xf]
      %v233 = vld [vmem:[%s193 + $0x7c] sm:$0xf]
      %v234 = vld [vmem:[%s1] sm:$0xf]
      %v235 = vld [vmem:[%s1 + $0x4] sm:$0xf]
      %v236 = vld [vmem:[%s1 + $0x8] sm:$0xf]
      %v237 = vld [vmem:[%s1 + $0xc] sm:$0xf]
      %v238 = vld [vmem:[%s2] sm:$0xff]
      %v239 = vld [vmem:[%s2 + $0x8] sm:$0xff]
      %v240 = vld [vmem:[%s2 + $0x10] sm:$0xff]
      %v241 = vld [vmem:[%s2 + $0x18] sm:$0xff]
      %243 = vset.pattern.permute.xlu0 0
      %244 = vperm.xlu0 %243, %v238
      %v245 = vpop.permute.xlu0 %244
      %248 = vset.pattern.permute.xlu0 0
      %249 = vperm.xlu0 %248, %v239
      %v250 = vpop.permute.xlu0 %249
      %253 = vset.pattern.permute.xlu0 0
      %254 = vperm.xlu0 %253, %v240
      %v255 = vpop.permute.xlu0 %254
      %258 = vset.pattern.permute.xlu0 0
      %259 = vperm.xlu0 %258, %v241
      %v260 = vpop.permute.xlu0 %259
      %v266 = vunpack.c.l.b16 %v234
      %v267 = vunpack.c.l.b16 %v235
      %v268 = vunpack.c.l.b16 %v236
      %v269 = vunpack.c.l.b16 %v237
      %v270 = vpack.c.b16 %v267, %v266
      %v271 = vpack.c.b16 %v269, %v268
      %v304 = vunpack.c.l.b16 %v202
      %v305 = vunpack.c.l.b16 %v203
      %v306 = vunpack.c.l.b16 %v204
      %v307 = vunpack.c.l.b16 %v205
      %v308 = vunpack.c.l.b16 %v206
      %v309 = vunpack.c.l.b16 %v207
      %v310 = vunpack.c.l.b16 %v208
      %v311 = vunpack.c.l.b16 %v209
      %v312 = vunpack.c.l.b16 %v210
      %v313 = vunpack.c.l.b16 %v211
      %v314 = vunpack.c.l.b16 %v212
      %v315 = vunpack.c.l.b16 %v213
      %v316 = vunpack.c.l.b16 %v214
      %v317 = vunpack.c.l.b16 %v215
      %v318 = vunpack.c.l.b16 %v216
      %v319 = vunpack.c.l.b16 %v217
      %v320 = vunpack.c.l.b16 %v218
      %v321 = vunpack.c.l.b16 %v219
      %v322 = vunpack.c.l.b16 %v220
      %v323 = vunpack.c.l.b16 %v221
      %v324 = vunpack.c.l.b16 %v222
      %v325 = vunpack.c.l.b16 %v223
      %v326 = vunpack.c.l.b16 %v224
      %v327 = vunpack.c.l.b16 %v225
      %v328 = vunpack.c.l.b16 %v226
      %v329 = vunpack.c.l.b16 %v227
      %v330 = vunpack.c.l.b16 %v228
      %v331 = vunpack.c.l.b16 %v229
      %v332 = vunpack.c.l.b16 %v230
      %v333 = vunpack.c.l.b16 %v231
      %v334 = vunpack.c.l.b16 %v232
      %v335 = vunpack.c.l.b16 %v233
      %v336 = vpack.c.b16 %v305, %v304
      %v337 = vpack.c.b16 %v307, %v306
      %v338 = vpack.c.b16 %v309, %v308
      %v339 = vpack.c.b16 %v311, %v310
      %v340 = vpack.c.b16 %v313, %v312
      %v341 = vpack.c.b16 %v315, %v314
      %v342 = vpack.c.b16 %v317, %v316
      %v343 = vpack.c.b16 %v319, %v318
      %v344 = vpack.c.b16 %v321, %v320
      %v345 = vpack.c.b16 %v323, %v322
      %v346 = vpack.c.b16 %v325, %v324
      %v347 = vpack.c.b16 %v327, %v326
      %v348 = vpack.c.b16 %v329, %v328
      %v349 = vpack.c.b16 %v331, %v330
      %v350 = vpack.c.b16 %v333, %v332
      %v351 = vpack.c.b16 %v335, %v334
      %vm352 = vcmask 261120
      %v354 = vsel %vm352, %v270, 0
      %v357 = vsel %vm352, %v271, 0
      %v360 = vsel %vm352, %v336, 0
      %v363 = vsel %vm352, %v337, 0
      %v366 = vsel %vm352, %v338, 0
      %v369 = vsel %vm352, %v339, 0
      %v372 = vsel %vm352, %v340, 0
      %v375 = vsel %vm352, %v341, 0
      %v378 = vsel %vm352, %v342, 0
      %v381 = vsel %vm352, %v343, 0
      %v384 = vsel %vm352, %v344, 0
      %v387 = vsel %vm352, %v345, 0
      %v390 = vsel %vm352, %v346, 0
      %v393 = vsel %vm352, %v347, 0
      %v396 = vsel %vm352, %v348, 0
      %v399 = vsel %vm352, %v349, 0
      %v402 = vsel %vm352, %v350, 0
      %v405 = vsel %vm352, %v351, 0
      %407 = vmatpush.bf16.xpose.msra.mxu0 %v381
      %408 = vmatpush.bf16.xpose.msra.mxu0 %v378
      %409 = vmatpush.bf16.xpose.msra.mxu0 %v375
      %410 = vmatpush.bf16.xpose.msra.mxu0 %v372
      %411 = vmatpush.bf16.xpose.msra.mxu0 %v369
      %412 = vmatpush.bf16.xpose.msra.mxu0 %v366
      %413 = vmatpush.bf16.xpose.msra.mxu0 %v363
      %414 = vmatpush.bf16.xpose.msra.mxu0 %v360
      %415 = vmatmul.bf16.gmra.mxu0 %v354
      %v416 = vpop.f32.mrf.mxu0
      %v417 = vadd.f32 %v245, %v416
      %v418 = vpop.f32.mrf.mxu0
      %v419 = vadd.f32 %v250, %v418
      %420 = vmatmul.bf16.gmra.mxu0 %v357
      %v421 = vpop.f32.mrf.mxu0
      %v422 = vadd.f32 %v255, %v421
      %v423 = vpop.f32.mrf.mxu0
      %v424 = vadd.f32 %v260, %v423
      %425 = vdwg.mxu0
      %426 = vmatpush.bf16.xpose.msra.mxu0 %v405
      %427 = vmatpush.bf16.xpose.msra.mxu0 %v402
      %428 = vmatpush.bf16.xpose.msra.mxu0 %v399
      %429 = vmatpush.bf16.xpose.msra.mxu0 %v396
      %430 = vmatpush.bf16.xpose.msra.mxu0 %v393
      %431 = vmatpush.bf16.xpose.msra.mxu0 %v390
      %432 = vmatpush.bf16.xpose.msra.mxu0 %v387
      %433 = vmatpush.bf16.xpose.msra.mxu0 %v384
      %434 = vmatmul.bf16.gmra.mxu0 %v354
      %v435 = vpop.f32.mrf.mxu0
      %v436 = vadd.f32 %v245, %v435
      %v437 = vpop.f32.mrf.mxu0
      %v438 = vadd.f32 %v250, %v437
      %439 = vmatmul.bf16.gmra.mxu0 %v357
      %v440 = vpop.f32.mrf.mxu0
      %v441 = vadd.f32 %v255, %v440
      %v442 = vpop.f32.mrf.mxu0
      %v443 = vadd.f32 %v260, %v442
      %444 = vdwg.mxu0
      %v445 = vmax.f32 %v417, 0.0
      %v446 = vmax.f32 %v436, 0.0
      %v447 = vmax.f32 %v419, 0.0
      %v448 = vmax.f32 %v438, 0.0
      %v449 = vmax.f32 %v422, 0.0
      %v450 = vmax.f32 %v441, 0.0
      %v451 = vmax.f32 %v424, 0.0
      %v452 = vmax.f32 %v443, 0.0
      %v453 = vld [vmem:[%s1 + $0x10] sm:$0xf]
      %v454 = vld [vmem:[%s1 + $0x14] sm:$0xf]
      %v455 = vld [vmem:[%s1 + $0x18] sm:$0xf]
      %v456 = vld [vmem:[%s1 + $0x1c] sm:$0xf]
      %v457 = vpack.c.bf16 %v447, %v445
      %v458 = vpack.c.bf16 %v448, %v446
      %v459 = vpack.c.bf16 %v451, %v449
      %v460 = vpack.c.bf16 %v452, %v450
      %v461 = vld [vmem:[%s2 + $0x20] sm:$0xff]
      %v462 = vld [vmem:[%s2 + $0x28] sm:$0xff]
      %v463 = vld [vmem:[%s2 + $0x30] sm:$0xff]
      %v464 = vld [vmem:[%s2 + $0x38] sm:$0xff]
      %466 = vset.pattern.permute.xlu0 0
      %467 = vperm.xlu0 %466, %v461
      %v468 = vpop.permute.xlu0 %467
      %471 = vset.pattern.permute.xlu0 0
      %472 = vperm.xlu0 %471, %v462
      %v473 = vpop.permute.xlu0 %472
      %476 = vset.pattern.permute.xlu0 0
      %477 = vperm.xlu0 %476, %v463
      %v478 = vpop.permute.xlu0 %477
      %481 = vset.pattern.permute.xlu0 0
      %482 = vperm.xlu0 %481, %v464
      %v483 = vpop.permute.xlu0 %482
      %v489 = vunpack.c.l.b16 %v453
      %v490 = vunpack.c.l.b16 %v454
      %v491 = vunpack.c.l.b16 %v455
      %v492 = vunpack.c.l.b16 %v456
      %v493 = vpack.c.b16 %v490, %v489
      %v494 = vpack.c.b16 %v492, %v491
      %v496 = vsel %vm352, %v493, 0
      %v499 = vsel %vm352, %v494, 0
      %501 = vmatpush.bf16.msra.mxu0 0
      %502 = vmatpush.bf16.msra.mxu0 0
      %503 = vmatpush.bf16.msra.mxu0 0
      %504 = vmatpush.bf16.msra.mxu0 0
      %505 = vmatpush.bf16.msra.mxu0 0
      %506 = vmatpush.bf16.msra.mxu0 0
      %507 = vmatpush.bf16.msra.mxu0 %v459
      %508 = vmatpush.bf16.msra.mxu0 %v457
      %509 = vmatmul.bf16.gmra.mxu0 %v496
      %v510 = vpop.f32.mrf.mxu0
      %v511 = vadd.f32 %v468, %v510
      %v512 = vpop.f32.mrf.mxu0
      %v513 = vadd.f32 %v473, %v512
      %514 = vmatmul.bf16.gmra.mxu0 %v499
      %v515 = vpop.f32.mrf.mxu0
      %v516 = vadd.f32 %v478, %v515
      %v517 = vpop.f32.mrf.mxu0
      %v518 = vadd.f32 %v483, %v517
      %519 = vdwg.mxu0
      %520 = vmatpush.bf16.msra.mxu0 0
      %521 = vmatpush.bf16.msra.mxu0 0
      %522 = vmatpush.bf16.msra.mxu0 0
      %523 = vmatpush.bf16.msra.mxu0 0
      %524 = vmatpush.bf16.msra.mxu0 0
      %525 = vmatpush.bf16.msra.mxu0 0
      %526 = vmatpush.bf16.msra.mxu0 %v460
      %527 = vmatpush.bf16.msra.mxu0 %v458
      %528 = vmatmul.bf16.gmra.mxu0 %v496
      %v529 = vpop.f32.mrf.mxu0
      %v530 = vadd.f32 %v468, %v529
      %v531 = vpop.f32.mrf.mxu0
      %v532 = vadd.f32 %v473, %v531
      %533 = vmatmul.bf16.gmra.mxu0 %v499
      %v534 = vpop.f32.mrf.mxu0
      %v535 = vadd.f32 %v478, %v534
      %v536 = vpop.f32.mrf.mxu0
      %v537 = vadd.f32 %v483, %v536
      %538 = vdwg.mxu0
      %v539 = vmax.f32 %v511, 0.0
      %v540 = vmax.f32 %v530, 0.0
      %v541 = vmax.f32 %v513, 0.0
      %v542 = vmax.f32 %v532, 0.0
      %v543 = vmax.f32 %v516, 0.0
      %v544 = vmax.f32 %v535, 0.0
      %v545 = vmax.f32 %v518, 0.0
      %v546 = vmax.f32 %v537, 0.0
      %v547 = vld [vmem:[%s1 + $0x20] sm:$0xf]
      %v548 = vld [vmem:[%s1 + $0x24] sm:$0xf]
      %v549 = vld [vmem:[%s1 + $0x28] sm:$0xf]
      %v550 = vld [vmem:[%s1 + $0x2c] sm:$0xf]
      %v551 = vpack.c.bf16 %v541, %v539
      %v552 = vpack.c.bf16 %v542, %v540
      %v553 = vpack.c.bf16 %v545, %v543
      %v554 = vpack.c.bf16 %v546, %v544
      %v555 = vld [vmem:[%s2 + $0x40] sm:$0xff]
      %v556 = vld [vmem:[%s2 + $0x48] sm:$0xff]
      %v557 = vld [vmem:[%s2 + $0x50] sm:$0xff]
      %v558 = vld [vmem:[%s2 + $0x58] sm:$0xff]
      %560 = vset.pattern.permute.xlu0 0
      %561 = vperm.xlu0 %560, %v555
      %v562 = vpop.permute.xlu0 %561
      %565 = vset.pattern.permute.xlu0 0
      %566 = vperm.xlu0 %565, %v556
      %v567 = vpop.permute.xlu0 %566
      %570 = vset.pattern.permute.xlu0 0
      %571 = vperm.xlu0 %570, %v557
      %v572 = vpop.permute.xlu0 %571
      %575 = vset.pattern.permute.xlu0 0
      %576 = vperm.xlu0 %575, %v558
      %v577 = vpop.permute.xlu0 %576
      %v583 = vunpack.c.l.b16 %v547
      %v584 = vunpack.c.l.b16 %v548
      %v585 = vunpack.c.l.b16 %v549
      %v586 = vunpack.c.l.b16 %v550
      %v587 = vpack.c.b16 %v584, %v583
      %v588 = vpack.c.b16 %v586, %v585
      %v590 = vsel %vm352, %v587, 0
      %v593 = vsel %vm352, %v588, 0
      %595 = vmatpush.bf16.msra.mxu0 0
      %596 = vmatpush.bf16.msra.mxu0 0
      %597 = vmatpush.bf16.msra.mxu0 0
      %598 = vmatpush.bf16.msra.mxu0 0
      %599 = vmatpush.bf16.msra.mxu0 0
      %600 = vmatpush.bf16.msra.mxu0 0
      %601 = vmatpush.bf16.msra.mxu0 %v553
      %602 = vmatpush.bf16.msra.mxu0 %v551
      %603 = vmatmul.bf16.gmra.mxu0 %v590
      %v604 = vpop.f32.mrf.mxu0
      %v605 = vadd.f32 %v562, %v604
      %v606 = vpop.f32.mrf.mxu0
      %v607 = vadd.f32 %v567, %v606
      %608 = vmatmul.bf16.gmra.mxu0 %v593
      %v609 = vpop.f32.mrf.mxu0
      %v610 = vadd.f32 %v572, %v609
      %v611 = vpop.f32.mrf.mxu0
      %v612 = vadd.f32 %v577, %v611
      %613 = vdwg.mxu0
      %614 = vmatpush.bf16.msra.mxu0 0
      %615 = vmatpush.bf16.msra.mxu0 0
      %616 = vmatpush.bf16.msra.mxu0 0
      %617 = vmatpush.bf16.msra.mxu0 0
      %618 = vmatpush.bf16.msra.mxu0 0
      %619 = vmatpush.bf16.msra.mxu0 0
      %620 = vmatpush.bf16.msra.mxu0 %v554
      %621 = vmatpush.bf16.msra.mxu0 %v552
      %622 = vmatmul.bf16.gmra.mxu0 %v590
      %v623 = vpop.f32.mrf.mxu0
      %v624 = vadd.f32 %v562, %v623
      %v625 = vpop.f32.mrf.mxu0
      %v626 = vadd.f32 %v567, %v625
      %627 = vmatmul.bf16.gmra.mxu0 %v593
      %v628 = vpop.f32.mrf.mxu0
      %v629 = vadd.f32 %v572, %v628
      %v630 = vpop.f32.mrf.mxu0
      %v631 = vadd.f32 %v577, %v630
      %632 = vdwg.mxu0
      %v633 = vmax.f32 %v605, 0.0
      %v634 = vmax.f32 %v624, 0.0
      %v635 = vmax.f32 %v607, 0.0
      %v636 = vmax.f32 %v626, 0.0
      %v637 = vmax.f32 %v610, 0.0
      %v638 = vmax.f32 %v629, 0.0
      %v639 = vmax.f32 %v612, 0.0
      %v640 = vmax.f32 %v631, 0.0
      %v641 = vld [vmem:[%s1 + $0x30] sm:$0xf]
      %v642 = vld [vmem:[%s1 + $0x34] sm:$0xf]
      %v643 = vld [vmem:[%s1 + $0x38] sm:$0xf]
      %v644 = vld [vmem:[%s1 + $0x3c] sm:$0xf]
      %v645 = vpack.c.bf16 %v635, %v633
      %v646 = vpack.c.bf16 %v636, %v634
      %v647 = vpack.c.bf16 %v639, %v637
      %v648 = vpack.c.bf16 %v640, %v638
      %v649 = vld [vmem:[%s2 + $0x60] sm:$0xff]
      %v650 = vld [vmem:[%s2 + $0x68] sm:$0xff]
      %v651 = vld [vmem:[%s2 + $0x70] sm:$0xff]
      %v652 = vld [vmem:[%s2 + $0x78] sm:$0xff]
      %654 = vset.pattern.permute.xlu0 0
      %655 = vperm.xlu0 %654, %v649
      %v656 = vpop.permute.xlu0 %655
      %659 = vset.pattern.permute.xlu0 0
      %660 = vperm.xlu0 %659, %v650
      %v661 = vpop.permute.xlu0 %660
      %664 = vset.pattern.permute.xlu0 0
      %665 = vperm.xlu0 %664, %v651
      %v666 = vpop.permute.xlu0 %665
      %669 = vset.pattern.permute.xlu0 0
      %670 = vperm.xlu0 %669, %v652
      %v671 = vpop.permute.xlu0 %670
      %v677 = vunpack.c.l.b16 %v641
      %v678 = vunpack.c.l.b16 %v642
      %v679 = vunpack.c.l.b16 %v643
      %v680 = vunpack.c.l.b16 %v644
      %v681 = vpack.c.b16 %v678, %v677
      %v682 = vpack.c.b16 %v680, %v679
      %v684 = vsel %vm352, %v681, 0
      %v687 = vsel %vm352, %v682, 0
      %689 = vmatpush.bf16.msra.mxu0 0
      %690 = vmatpush.bf16.msra.mxu0 0
      %691 = vmatpush.bf16.msra.mxu0 0
      %692 = vmatpush.bf16.msra.mxu0 0
      %693 = vmatpush.bf16.msra.mxu0 0
      %694 = vmatpush.bf16.msra.mxu0 0
      %695 = vmatpush.bf16.msra.mxu0 %v647
      %696 = vmatpush.bf16.msra.mxu0 %v645
      %697 = vmatmul.bf16.gmra.mxu0 %v684
      %v698 = vpop.f32.mrf.mxu0
      %v699 = vadd.f32 %v656, %v698
      %v700 = vpop.f32.mrf.mxu0
      %v701 = vadd.f32 %v661, %v700
      %702 = vmatmul.bf16.gmra.mxu0 %v687
      %v703 = vpop.f32.mrf.mxu0
      %v704 = vadd.f32 %v666, %v703
      %v705 = vpop.f32.mrf.mxu0
      %v706 = vadd.f32 %v671, %v705
      %707 = vdwg.mxu0
      %708 = vmatpush.bf16.msra.mxu0 0
      %709 = vmatpush.bf16.msra.mxu0 0
      %710 = vmatpush.bf16.msra.mxu0 0
      %711 = vmatpush.bf16.msra.mxu0 0
      %712 = vmatpush.bf16.msra.mxu0 0
      %713 = vmatpush.bf16.msra.mxu0 0
      %714 = vmatpush.bf16.msra.mxu0 %v648
      %715 = vmatpush.bf16.msra.mxu0 %v646
      %716 = vmatmul.bf16.gmra.mxu0 %v684
      %v717 = vpop.f32.mrf.mxu0
      %v718 = vadd.f32 %v656, %v717
      %v719 = vpop.f32.mrf.mxu0
      %v720 = vadd.f32 %v661, %v719
      %721 = vmatmul.bf16.gmra.mxu0 %v687
      %v722 = vpop.f32.mrf.mxu0
      %v723 = vadd.f32 %v666, %v722
      %v724 = vpop.f32.mrf.mxu0
      %v725 = vadd.f32 %v671, %v724
      %726 = vdwg.mxu0
      %v727 = vmax.f32 %v699, 0.0
      %v728 = vmax.f32 %v718, 0.0
      %v729 = vmax.f32 %v701, 0.0
      %v730 = vmax.f32 %v720, 0.0
      %v731 = vmax.f32 %v704, 0.0
      %v732 = vmax.f32 %v723, 0.0
      %v733 = vmax.f32 %v706, 0.0
      %v734 = vmax.f32 %v725, 0.0
      %v735 = vld [vmem:[%s1 + $0x40] sm:$0xf]
      %v736 = vld [vmem:[%s1 + $0x44] sm:$0xf]
      %v737 = vld [vmem:[%s1 + $0x48] sm:$0xf]
      %v738 = vld [vmem:[%s1 + $0x4c] sm:$0xf]
      %v739 = vpack.c.bf16 %v729, %v727
      %v740 = vpack.c.bf16 %v730, %v728
      %v741 = vpack.c.bf16 %v733, %v731
      %v742 = vpack.c.bf16 %v734, %v732
      %v743 = vld [vmem:[%s2 + $0x80] sm:$0xff]
      %v744 = vld [vmem:[%s2 + $0x88] sm:$0xff]
      %v745 = vld [vmem:[%s2 + $0x90] sm:$0xff]
      %v746 = vld [vmem:[%s2 + $0x98] sm:$0xff]
      %748 = vset.pattern.permute.xlu0 0
      %749 = vperm.xlu0 %748, %v743
      %v750 = vpop.permute.xlu0 %749
      %753 = vset.pattern.permute.xlu0 0
      %754 = vperm.xlu0 %753, %v744
      %v755 = vpop.permute.xlu0 %754
      %758 = vset.pattern.permute.xlu0 0
      %759 = vperm.xlu0 %758, %v745
      %v760 = vpop.permute.xlu0 %759
      %763 = vset.pattern.permute.xlu0 0
      %764 = vperm.xlu0 %763, %v746
      %v765 = vpop.permute.xlu0 %764
      %v771 = vunpack.c.l.b16 %v735
      %v772 = vunpack.c.l.b16 %v736
      %v773 = vunpack.c.l.b16 %v737
      %v774 = vunpack.c.l.b16 %v738
      %v775 = vpack.c.b16 %v772, %v771
      %v776 = vpack.c.b16 %v774, %v773
      %v778 = vsel %vm352, %v775, 0
      %v781 = vsel %vm352, %v776, 0
      %783 = vmatpush.bf16.msra.mxu0 0
      %784 = vmatpush.bf16.msra.mxu0 0
      %785 = vmatpush.bf16.msra.mxu0 0
      %786 = vmatpush.bf16.msra.mxu0 0
      %787 = vmatpush.bf16.msra.mxu0 0
      %788 = vmatpush.bf16.msra.mxu0 0
      %789 = vmatpush.bf16.msra.mxu0 %v741
      %790 = vmatpush.bf16.msra.mxu0 %v739
      %791 = vmatmul.bf16.gmra.mxu0 %v778
      %v792 = vpop.f32.mrf.mxu0
      %v793 = vadd.f32 %v750, %v792
      %v794 = vpop.f32.mrf.mxu0
      %v795 = vadd.f32 %v755, %v794
      %796 = vmatmul.bf16.gmra.mxu0 %v781
      %v797 = vpop.f32.mrf.mxu0
      %v798 = vadd.f32 %v760, %v797
      %v799 = vpop.f32.mrf.mxu0
      %v800 = vadd.f32 %v765, %v799
      %801 = vdwg.mxu0
      %802 = vmatpush.bf16.msra.mxu0 0
      %803 = vmatpush.bf16.msra.mxu0 0
      %804 = vmatpush.bf16.msra.mxu0 0
      %805 = vmatpush.bf16.msra.mxu0 0
      %806 = vmatpush.bf16.msra.mxu0 0
      %807 = vmatpush.bf16.msra.mxu0 0
      %808 = vmatpush.bf16.msra.mxu0 %v742
      %809 = vmatpush.bf16.msra.mxu0 %v740
      %810 = vmatmul.bf16.gmra.mxu0 %v778
      %v811 = vpop.f32.mrf.mxu0
      %v812 = vadd.f32 %v750, %v811
      %v813 = vpop.f32.mrf.mxu0
      %v814 = vadd.f32 %v755, %v813
      %815 = vmatmul.bf16.gmra.mxu0 %v781
      %v816 = vpop.f32.mrf.mxu0
      %v817 = vadd.f32 %v760, %v816
      %v818 = vpop.f32.mrf.mxu0
      %v819 = vadd.f32 %v765, %v818
      %820 = vdwg.mxu0
      %v821 = vmax.f32 %v793, 0.0
      %v822 = vmax.f32 %v812, 0.0
      %v823 = vmax.f32 %v795, 0.0
      %v824 = vmax.f32 %v814, 0.0
      %v825 = vmax.f32 %v798, 0.0
      %v826 = vmax.f32 %v817, 0.0
      %v827 = vmax.f32 %v800, 0.0
      %v828 = vmax.f32 %v819, 0.0
      %v829 = vld [vmem:[%s1 + $0x50] sm:$0xf]
      %v830 = vld [vmem:[%s1 + $0x54] sm:$0xf]
      %v831 = vld [vmem:[%s1 + $0x58] sm:$0xf]
      %v832 = vld [vmem:[%s1 + $0x5c] sm:$0xf]
      %v833 = vpack.c.bf16 %v823, %v821
      %v834 = vpack.c.bf16 %v824, %v822
      %v835 = vpack.c.bf16 %v827, %v825
      %v836 = vpack.c.bf16 %v828, %v826
      %v837 = vld [vmem:[%s3] sm:$0x1]
      %v839 = vperm.slane %v837, 0
      %841 = vxpose.binary.xlu0.c.b16.start [1/16] %v834, %v833, 128
      %842 = vxpose.binary.xlu0.c.b16.cont [2/16] %v836, %v835, 128
      %843 = vxpose.binary.xlu0.c.b16.cont [3/16] 0, 0, 128
      %844 = vxpose.binary.xlu0.c.b16.cont [4/16] 0, 0, 128
      %845 = vxpose.binary.xlu0.c.b16.cont [5/16] 0, 0, 128
      %846 = vxpose.binary.xlu0.c.b16.cont [6/16] 0, 0, 128
      %847 = vxpose.binary.xlu0.c.b16.cont [7/16] 0, 0, 128
      %848 = vxpose.binary.xlu0.c.b16.end [8/16] 0, 0, 128
      %v849 = vpop.trf.xlu0
      %v850 = vpop.trf.xlu0
      %v851 = vpop.trf.xlu0
      %v852 = vpop.trf.xlu0
      %v853 = vpop.trf.xlu0
      %v854 = vpop.trf.xlu0
      %v855 = vpop.trf.xlu0
      %v856 = vpop.trf.xlu0
      %v857 = vpop.trf.xlu0
      %v858 = vpop.trf.xlu0
      %v859 = vpop.trf.xlu0
      %v860 = vpop.trf.xlu0
      %v861 = vpop.trf.xlu0
      %v862 = vpop.trf.xlu0
      %v863 = vpop.trf.xlu0
      %v864 = vpop.trf.xlu0
      %v869 = vunpack.c.l.b16 %v829
      %v870 = vunpack.c.l.b16 %v830
      %v871 = vunpack.c.l.b16 %v831
      %v872 = vunpack.c.l.b16 %v832
      %v873 = vpack.c.b16 %v870, %v869
      %v874 = vpack.c.b16 %v872, %v871
      %v878 = vsel %vm352, %v849, 0
      %v881 = vsel %vm352, %v851, 0
      %v884 = vsel %vm352, %v853, 0
      %v887 = vsel %vm352, %v855, 0
      %v890 = vsel %vm352, %v857, 0
      %v893 = vsel %vm352, %v859, 0
      %v896 = vsel %vm352, %v861, 0
      %v899 = vsel %vm352, %v863, 0
      %v902 = vsel %vm352, %v850, 0
      %v905 = vsel %vm352, %v852, 0
      %v908 = vsel %vm352, %v854, 0
      %v911 = vsel %vm352, %v856, 0
      %v914 = vsel %vm352, %v858, 0
      %v917 = vsel %vm352, %v860, 0
      %v920 = vsel %vm352, %v862, 0
      %v923 = vsel %vm352, %v864, 0
      %925 = vmatpush.bf16.msra.mxu0 0
      %926 = vmatpush.bf16.msra.mxu0 0
      %927 = vmatpush.bf16.msra.mxu0 0
      %928 = vmatpush.bf16.msra.mxu0 0
      %929 = vmatpush.bf16.msra.mxu0 0
      %930 = vmatpush.bf16.msra.mxu0 0
      %931 = vmatpush.bf16.msra.mxu0 %v874
      %932 = vmatpush.bf16.msra.mxu0 %v873
      %933 = vmatmul.bf16.gmra.mxu0 %v878
      %v934 = vpop.f32.mrf.mxu0
      %v935 = vadd.f32 %v839, %v934
      %v936 = vpop.f32.mrf.mxu0
      %v937 = vadd.f32 %v839, %v936
      %938 = vmatmul.bf16.gmra.mxu0 %v881
      %v939 = vpop.f32.mrf.mxu0
      %v940 = vadd.f32 %v839, %v939
      %v941 = vpop.f32.mrf.mxu0
      %v942 = vadd.f32 %v839, %v941
      %943 = vmatmul.bf16.gmra.mxu0 %v884
      %v944 = vpop.f32.mrf.mxu0
      %v945 = vadd.f32 %v839, %v944
      %v946 = vpop.f32.mrf.mxu0
      %v947 = vadd.f32 %v839, %v946
      %948 = vmatmul.bf16.gmra.mxu0 %v887
      %v949 = vpop.f32.mrf.mxu0
      %v950 = vadd.f32 %v839, %v949
      %v951 = vpop.f32.mrf.mxu0
      %v952 = vadd.f32 %v839, %v951
      %953 = vmatmul.bf16.gmra.mxu0 %v890
      %v954 = vpop.f32.mrf.mxu0
      %v955 = vadd.f32 %v839, %v954
      %v956 = vpop.f32.mrf.mxu0
      %v957 = vadd.f32 %v839, %v956
      %958 = vmatmul.bf16.gmra.mxu0 %v893
      %v959 = vpop.f32.mrf.mxu0
      %v960 = vadd.f32 %v839, %v959
      %v961 = vpop.f32.mrf.mxu0
      %v962 = vadd.f32 %v839, %v961
      %963 = vmatmul.bf16.gmra.mxu0 %v896
      %v964 = vpop.f32.mrf.mxu0
      %v965 = vadd.f32 %v839, %v964
      %v966 = vpop.f32.mrf.mxu0
      %v967 = vadd.f32 %v839, %v966
      %968 = vmatmul.bf16.gmra.mxu0 %v899
      %v969 = vpop.f32.mrf.mxu0
      %v970 = vadd.f32 %v839, %v969
      %v971 = vpop.f32.mrf.mxu0
      %v972 = vadd.f32 %v839, %v971
      %973 = vmatmul.bf16.gmra.mxu0 %v902
      %v974 = vpop.f32.mrf.mxu0
      %v975 = vadd.f32 %v839, %v974
      %v976 = vpop.f32.mrf.mxu0
      %v977 = vadd.f32 %v839, %v976
      %978 = vmatmul.bf16.gmra.mxu0 %v905
      %v979 = vpop.f32.mrf.mxu0
      %v980 = vadd.f32 %v839, %v979
      %v981 = vpop.f32.mrf.mxu0
      %v982 = vadd.f32 %v839, %v981
      %983 = vmatmul.bf16.gmra.mxu0 %v908
      %v984 = vpop.f32.mrf.mxu0
      %v985 = vadd.f32 %v839, %v984
      %v986 = vpop.f32.mrf.mxu0
      %v987 = vadd.f32 %v839, %v986
      %988 = vmatmul.bf16.gmra.mxu0 %v911
      %v989 = vpop.f32.mrf.mxu0
      %v990 = vadd.f32 %v839, %v989
      %v991 = vpop.f32.mrf.mxu0
      %v992 = vadd.f32 %v839, %v991
      %993 = vmatmul.bf16.gmra.mxu0 %v914
      %v994 = vpop.f32.mrf.mxu0
      %v995 = vadd.f32 %v839, %v994
      %v996 = vpop.f32.mrf.mxu0
      %v997 = vadd.f32 %v839, %v996
      %998 = vmatmul.bf16.gmra.mxu0 %v917
      %v999 = vpop.f32.mrf.mxu0
      %v1000 = vadd.f32 %v839, %v999
      %v1001 = vpop.f32.mrf.mxu0
      %v1002 = vadd.f32 %v839, %v1001
      %1003 = vmatmul.bf16.gmra.mxu0 %v920
      %v1004 = vpop.f32.mrf.mxu0
      %v1005 = vadd.f32 %v839, %v1004
      %v1006 = vpop.f32.mrf.mxu0
      %v1007 = vadd.f32 %v839, %v1006
      %1008 = vmatmul.bf16.gmra.mxu0 %v923
      %v1009 = vpop.f32.mrf.mxu0
      %v1010 = vadd.f32 %v839, %v1009
      %v1011 = vpop.f32.mrf.mxu0
      %v1012 = vadd.f32 %v839, %v1011
      %1013 = vdwg.mxu0
      %v1014 = vmax.f32 %v935, 0.0
      %v1015 = vmax.f32 %v937, 0.0
      %v1016 = vmax.f32 %v940, 0.0
      %v1017 = vmax.f32 %v942, 0.0
      %v1018 = vmax.f32 %v945, 0.0
      %v1019 = vmax.f32 %v947, 0.0
      %v1020 = vmax.f32 %v950, 0.0
      %v1021 = vmax.f32 %v952, 0.0
      %v1022 = vmax.f32 %v955, 0.0
      %v1023 = vmax.f32 %v957, 0.0
      %v1024 = vmax.f32 %v960, 0.0
      %v1025 = vmax.f32 %v962, 0.0
      %v1026 = vmax.f32 %v965, 0.0
      %v1027 = vmax.f32 %v967, 0.0
      %v1028 = vmax.f32 %v970, 0.0
      %v1029 = vmax.f32 %v972, 0.0
      %v1030 = vmax.f32 %v975, 0.0
      %v1031 = vmax.f32 %v977, 0.0
      %v1032 = vmax.f32 %v980, 0.0
      %v1033 = vmax.f32 %v982, 0.0
      %v1034 = vmax.f32 %v985, 0.0
      %v1035 = vmax.f32 %v987, 0.0
      %v1036 = vmax.f32 %v990, 0.0
      %v1037 = vmax.f32 %v992, 0.0
      %v1038 = vmax.f32 %v995, 0.0
      %v1039 = vmax.f32 %v997, 0.0
      %v1040 = vmax.f32 %v1000, 0.0
      %v1041 = vmax.f32 %v1002, 0.0
      %v1042 = vmax.f32 %v1005, 0.0
      %v1043 = vmax.f32 %v1007, 0.0
      %v1044 = vmax.f32 %v1010, 0.0
      %v1045 = vmax.f32 %v1012, 0.0
      %1046 = vst.msk [vmem:[%s199] sm:$0xff] %vm352, %v1014
      %1047 = vst.msk [vmem:[%s199 + $0x8] sm:$0xff] %vm352, %v1015
      %1048 = vst.msk [vmem:[%s199 + $0x10] sm:$0xff] %vm352, %v1016
      %1049 = vst.msk [vmem:[%s199 + $0x18] sm:$0xff] %vm352, %v1017
      %1050 = vst.msk [vmem:[%s199 + $0x20] sm:$0xff] %vm352, %v1018
      %1051 = vst.msk [vmem:[%s199 + $0x28] sm:$0xff] %vm352, %v1019
      %1052 = vst.msk [vmem:[%s199 + $0x30] sm:$0xff] %vm352, %v1020
      %1053 = vst.msk [vmem:[%s199 + $0x38] sm:$0xff] %vm352, %v1021
      %1054 = vst.msk [vmem:[%s199 + $0x40] sm:$0xff] %vm352, %v1022
      %1055 = vst.msk [vmem:[%s199 + $0x48] sm:$0xff] %vm352, %v1023
      %1056 = vst.msk [vmem:[%s199 + $0x50] sm:$0xff] %vm352, %v1024
      %1057 = vst.msk [vmem:[%s199 + $0x58] sm:$0xff] %vm352, %v1025
      %1058 = vst.msk [vmem:[%s199 + $0x60] sm:$0xff] %vm352, %v1026
      %1059 = vst.msk [vmem:[%s199 + $0x68] sm:$0xff] %vm352, %v1027
      %1060 = vst.msk [vmem:[%s199 + $0x70] sm:$0xff] %vm352, %v1028
      %1061 = vst.msk [vmem:[%s199 + $0x78] sm:$0xff] %vm352, %v1029
      %1062 = vst.msk [vmem:[%s199 + $0x80] sm:$0xff] %vm352, %v1030
      %1063 = vst.msk [vmem:[%s199 + $0x88] sm:$0xff] %vm352, %v1031
      %1064 = vst.msk [vmem:[%s199 + $0x90] sm:$0xff] %vm352, %v1032
      %1065 = vst.msk [vmem:[%s199 + $0x98] sm:$0xff] %vm352, %v1033
      %1066 = vst.msk [vmem:[%s199 + $0xa0] sm:$0xff] %vm352, %v1034
      %1067 = vst.msk [vmem:[%s199 + $0xa8] sm:$0xff] %vm352, %v1035
      %1068 = vst.msk [vmem:[%s199 + $0xb0] sm:$0xff] %vm352, %v1036
      %1069 = vst.msk [vmem:[%s199 + $0xb8] sm:$0xff] %vm352, %v1037
      %1070 = vst.msk [vmem:[%s199 + $0xc0] sm:$0xff] %vm352, %v1038
      %1071 = vst.msk [vmem:[%s199 + $0xc8] sm:$0xff] %vm352, %v1039
      %1072 = vst.msk [vmem:[%s199 + $0xd0] sm:$0xff] %vm352, %v1040
      %1073 = vst.msk [vmem:[%s199 + $0xd8] sm:$0xff] %vm352, %v1041
      %1074 = vst.msk [vmem:[%s199 + $0xe0] sm:$0xff] %vm352, %v1042
      %1075 = vst.msk [vmem:[%s199 + $0xe8] sm:$0xff] %vm352, %v1043
      %1076 = vst.msk [vmem:[%s199 + $0xf0] sm:$0xff] %vm352, %v1044
      %1077 = vst.msk [vmem:[%s199 + $0xf8] sm:$0xff] %vm352, %v1045
      %s1078 = smul.u32 32, %s15
      %p1079 = scmp.lt.s32.totalorder %s1078, 127
      %s1080 = scalar_select %p1079, %s1078, 127
      %s1081 = smul.addr %s1080, 8
      %s1082 = scalar_lea.vmem %s4, %s1081
      // Predicated region
      $region37: #{tpu_custom_call.1} parent=35 // pred_check
        %p1083 = pneg %p122
      $region38: #{tpu_custom_call.1} parent=35 // pred_check_branch
        %1085 = sbr.rel (%p1083) target = $region40
      $region39: #{tpu_custom_call.1} parent=35 // pred_region
        %s1086 = smul.u32 32, %s15
      $region40: #{tpu_custom_call.1} parent=35 // pred_fallthru
        _
    $region36: #{tpu_custom_call.1} parent=5 // pred_fallthru
      _
    %p1087 = scmp.le.s32.totalorder 2, %s10
    // Predicated region
    $region41: #{tpu_custom_call.1} parent=5 // pred_check
      %p1088 = pneg %p1087
    $region42: #{tpu_custom_call.1} parent=5 // pred_check_branch
      %1090 = sbr.rel (%p1088) target = $region44
    $region43: #{tpu_custom_call.1} parent=5 // pred_region
      %s1091 = ssub.s32 %s10, 2
      // Predicated region
      $region45: #{tpu_custom_call.1} parent=43 // pred_check
        %p1092 = pneg %p128
      $region46: #{tpu_custom_call.1} parent=43 // pred_check_branch
        %1094 = sbr.rel (%p1092) target = $region48
      $region47: #{tpu_custom_call.1} parent=43 // pred_region
        %s1095 = smul.u32 32, %s16
        %p1096 = scmp.lt.s32.totalorder %s1095, 127
        %s1097 = scalar_select %p1096, %s1095, 127
        %s1098 = smul.addr %s1097, 8
        %s1099 = scalar_lea.vmem %s4, %s1098
      $region48: #{tpu_custom_call.1} parent=43 // pred_fallthru
        _
    $region44: #{tpu_custom_call.1} parent=5 // pred_fallthru
      _
  $region6: #{tpu_custom_call.1} parent=0 // loop_footer
    %s14 = sadd.s32 1, %s10
  $region7: #{tpu_custom_call.1} parent=0 // loop_footer_branch
    %9 = sbr.rel target = $region3
  $region8: #{tpu_custom_call.1} parent=0 // loop_exit
    _

</llo_original>
